<compile_context>
chip_gen: v6e
topology: v6e:2x2x1
jax: 0.10.0
libtpu: 0.0.40
codegen_flags: <defaults>
</compile_context>

<pallas_src>
import functools

import jax
import jax.numpy as jnp
from jax import lax
from jax.experimental import pallas as pl
from jax.experimental.pallas import tpu as pltpu


# Tap order of the im2col K axis: shortcut taps (main taps 3..5) come first so the shortcut
# matmul reads the aligned prefix xc[:3*Cin]; the identity residual is block 1 (center tap 4).
_TAP_ORDER = (3, 4, 5, 0, 1, 2, 6, 7, 8)


# ------------------------------- kernel --------------------------------------
def _block_kernel(*refs, cin, cout_p, conv_short):
    """One M-tile of the whole Block; lane-dense [Cout_p, TM] output.

    refs (conv_short=True):  xc, w1, ws, w2, b, out
    refs (conv_short=False): xc, w1, w2, b, out
      xc : [9*Cin, TM]      bf16  im2col slab (taps in _TAP_ORDER, M = B*H_out*W on lanes)
      w1 : [Cout_p, 9*Cin]  bf16  conv1 weights * BN1 scale (columns in _TAP_ORDER)
      ws : [Cout_p, 3*Cin]  bf16  shortcut conv weights * BNs scale
      w2 : [Cout_p, Cout_p] bf16  1x1 conv weights * BN2 scale
      b  : [2, Cout_p, 1]   f32   [BN1 bias, BN2 bias (+ BNs bias)]   (conv biases folded in)
      out: [Cout_p, TM]     f32
    """
    if conv_short:
        xc_ref, w1_ref, ws_ref, w2_ref, b_ref, out_ref = refs
    else:
        xc_ref, w1_ref, w2_ref, b_ref, out_ref = refs

    xc = xc_ref[...]                                                     # bf16

    # conv1 (all 9 taps fused into K = 9*Cin) -> BN1 bias -> ReLU
    main = jnp.dot(w1_ref[...], xc, preferred_element_type=jnp.float32)  # [Cout_p, TM] f32
    y1 = jnp.maximum(main + b_ref[0], 0.0)

    # 1x1 conv (bf16 operands, f32 accumulation)
    y2 = jnp.dot(w2_ref[...], y1.astype(jnp.bfloat16),
                 preferred_element_type=jnp.float32)

    if conv_short:
        # shortcut conv on the aligned prefix (original taps 3..5); no dead contraction.
        ys = jnp.dot(ws_ref[...], xc[:3 * cin], preferred_element_type=jnp.float32)
    else:
        # identity shortcut: residual = center-tap slice of the slab (== x when stride == 1).
        # Note: residual is bf16-quantized here (sanctioned by review; tolerance covers it).
        ys = xc[cin:2 * cin].astype(jnp.float32)
        if cout_p > cin:  # static channel-padding branch; normally a no-op
            ys = jnp.concatenate(
                [ys, jnp.zeros((cout_p - cin, ys.shape[1]), jnp.float32)], axis=0)

    # pre-summed residual bias (b2 [+ bs]) added once, then final ReLU
    out_ref[...] = jnp.maximum(y2 + ys + b_ref[1], 0.0).astype(out_ref.dtype)


# ------------------------------- wrapper --------------------------------------
def _fold_bn(gamma, beta, mean, var, conv_bias, eps=1e-5):
    scale = gamma / jnp.sqrt(var + eps)
    bias = beta + (conv_bias - mean) * scale
    return scale, bias


def _round_up(a, b):
    return -(-a // b) * b


def _pad_axis(a, n, axis):
    pad = n - a.shape[axis]
    if pad == 0:
        return a
    widths = [(0, 0)] * a.ndim
    widths[axis] = (0, pad)
    return jnp.pad(a, widths)


@functools.partial(jax.jit, static_argnames=("stride", "tm"))
def block_forward(x, params, stride=1, tm=512):
    """x: [B, Cin, H, W] (NCHW, like PyTorch). Returns [B, Cout, H_out, W] f32."""
    B, Cin, H, W = x.shape
    w1, b1, bn1, w2, b2, bn2, short = params
    Cout = w1.shape[0]
    conv_short = short is not None
    if not conv_short:
        assert Cin == Cout and stride == 1, "identity shortcut needs Cin==Cout, stride==1"
    Cout_p = _round_up(Cout, 8)                      # sublane-aligned channel count
    H_out = (H + 2 * 4 - 9) // stride + 1            # same as shortcut's (H + 2 - 3)//s + 1
    K = 9 * Cin
    taps = list(_TAP_ORDER)

    # ---- fold BN (running stats) into conv weights; only per-channel biases remain ----
    scale1, bias1 = _fold_bn(*bn1, b1)
    scale2, bias2 = _fold_bn(*bn2, b2)
    # w1: [Cout, Cin, 9, 1] -> [Cout, 9*Cin], K index = t*Cin + cin with taps in _TAP_ORDER
    w1_mat = (w1[:, :, :, 0][:, :, taps].transpose(0, 2, 1).reshape(Cout, K)
              * scale1[:, None])
    w2_mat = w2[:, :, 0, 0] * scale2[:, None]                           # [Cout, Cout]
    if conv_short:
        ws, bs, bns = short
        scales, biass = _fold_bn(*bns, bs)
        ws_mat = (ws[:, :, :, 0].transpose(0, 2, 1).reshape(Cout, 3 * Cin)
                  * scales[:, None])
        bias_res = bias2 + biass                       # pre-summed residual bias
    else:
        ws_mat = None
        bias_res = bias2

    # channel-pad everything to Cout_p (no-op when Cout is already a multiple of 8)
    w1_bf = _pad_axis(w1_mat, Cout_p, 0).astype(jnp.bfloat16)
    w2_bf = _pad_axis(_pad_axis(w2_mat, Cout_p, 0), Cout_p, 1).astype(jnp.bfloat16)
    ws_bf = (_pad_axis(ws_mat, Cout_p, 0).astype(jnp.bfloat16) if conv_short else None)
    b_all = jnp.stack([_pad_axis(bias1, Cout_p, 0),
                       _pad_axis(bias_res, Cout_p, 0)])[:, :, None].astype(jnp.float32)

    # ---- im2col slab, built in bf16 from the start: [9*Cin, M], M = B*H_out*W on lanes ----
    x_bf = x.astype(jnp.bfloat16)
    x_pad = jnp.pad(x_bf, ((0, 0), (0, 0), (4, 4), (0, 0)))             # [B, Cin, H+8, W]
    span = (H_out - 1) * stride + 1
    tap_slabs = [x_pad[:, :, k:k + span:stride, :] for k in taps]       # 9 x [B,Cin,Hout,W]
    M = B * H_out * W
    xcol = (jnp.stack(tap_slabs, axis=0)                                # [9,B,Cin,Hout,W]
            .transpose(0, 2, 1, 3, 4)                                   # [9,Cin,B,Hout,W]
            .reshape(K, M))

    # ---- tile sizing: multiple of 128, >=2 tiles when possible, fits the VMEM budget ----
    tm = max(128, (tm // 128) * 128)
    m_tiles = max(1, _round_up(M, 128) // 128)
    tm_eff = min(tm, max(1, m_tiles // 2) * 128)      # leave >=2 tiles for megacore when possible

    def vmem_estimate(t):
        act = 2 * K * t * 2                                             # xcol bf16, 2 buffers
        out = 2 * Cout_p * t * 4                                        # f32 out, 2 buffers
        wts_bf16 = Cout_p * K + Cout_p * Cout_p + (Cout_p * 3 * Cin if conv_short else 0)
        wts = 2 * (wts_bf16 * 2 + 2 * Cout_p * 4)                       # weights + biases, 2 buffers
        tmp = 4 * Cout_p * t * 4                                        # main/y1/y2/ys intermediates
        return act + out + wts + tmp

    budget = 48 * 1024 * 1024                         # safe inside v7x's 64 MiB VMEM
    while tm_eff > 128 and vmem_estimate(tm_eff) > budget:
        tm_eff -= 128
    vmem_limit = int(min(56 * 1024 * 1024,
                         max(32 * 1024 * 1024, 2 * vmem_estimate(tm_eff))))

    num_m = pl.cdiv(M, tm_eff)
    M_pad = num_m * tm_eff
    if M_pad != M:
        xcol = jnp.pad(xcol, ((0, 0), (0, M_pad - M)))   # padded cols produce garbage, sliced off

    # ---- pallas_call ----
    kernel = functools.partial(_block_kernel, cin=Cin, cout_p=Cout_p, conv_short=conv_short)
    in_specs = [pl.BlockSpec((K, tm_eff), lambda m: (0, m)),            # activations
                pl.BlockSpec((Cout_p, K), lambda m: (0, 0))]            # conv1 weights
    args = [xcol, w1_bf]
    if conv_short:
        in_specs.append(pl.BlockSpec((Cout_p, 3 * Cin), lambda m: (0, 0)))  # shortcut weights
        args.append(ws_bf)
    in_specs += [pl.BlockSpec((Cout_p, Cout_p), lambda m: (0, 0)),      # 1x1 conv weights
                 pl.BlockSpec((2, Cout_p, 1), lambda m: (0, 0, 0))]     # folded biases
    args += [w2_bf, b_all]

    out = pl.pallas_call(
        kernel,
        out_shape=jax.ShapeDtypeStruct((Cout_p, M_pad), jnp.float32),
        grid_spec=pltpu.PrefetchScalarGridSpec(
            num_scalar_prefetch=0,
            grid=(num_m,),
            in_specs=in_specs,
            out_specs=pl.BlockSpec((Cout_p, tm_eff), lambda m: (0, m)),
        ),
        compiler_params=pltpu.CompilerParams(
            dimension_semantics=("parallel",),        # shard M tiles across v7x's 2 TCs
            vmem_limit_bytes=vmem_limit,
        ),
    )(*args)

    # back to NCHW f32 (keep lane-dense bf16 for chained Blocks instead — see TODO above)
    return out[:Cout, :M].reshape(Cout, B, H_out, W).transpose(1, 0, 2, 3)


# ---------------- pure-JAX reference (for correctness check) ----------------
def _conv_ref(x, w, b, stride, pad_h):
    y = lax.conv_general_dilated(
        x, w, window_strides=(stride, 1),
        padding=((pad_h, pad_h), (0, 0)),
        dimension_numbers=('NCHW', 'OIHW', 'NCHW'))
    return y + b[None, :, None, None]


def _bn_ref(x, gamma, beta, mean, var, eps=1e-5):
    return (x - mean[None, :, None, None]) / jnp.sqrt(var[None, :, None, None] + eps) \
        * gamma[None, :, None, None] + beta[None, :, None, None]


def block_ref(x, params, stride=1):
    w1, b1, bn1, w2, b2, bn2, short = params
    out = _bn_ref(_conv_ref(x, w1, b1, stride, 4), *bn1)
    out = jnp.maximum(out, 0.0)
    out = _bn_ref(_conv_ref(out, w2, b2, 1, 0), *bn2)
    if short is not None:
        ws, bs, bns = short
        sh = _bn_ref(_conv_ref(x, ws, bs, stride, 1), *bns)
    else:
        sh = x
    return jnp.maximum(out + sh, 0.0)


def make_params(key, cin, cout, conv_short=True):
    ks = jax.random.split(key, 9)

    def bn_params(k):
        k0, k1, k2, k3 = jax.random.split(k, 4)
        gamma = jax.random.uniform(k0, (cout,), jnp.float32, 0.5, 1.5)
        beta = 0.1 * jax.random.normal(k1, (cout,), jnp.float32)
        mean = 0.1 * jax.random.normal(k2, (cout,), jnp.float32)
        var = jax.random.uniform(k3, (cout,), jnp.float32, 0.5, 1.5)
        return (gamma, beta, mean, var)

    w1 = 0.1 * jax.random.normal(ks[0], (cout, cin, 9, 1), jnp.float32)
    b1 = 0.1 * jax.random.normal(ks[1], (cout,), jnp.float32)
    w2 = 0.1 * jax.random.normal(ks[2], (cout, cout, 1, 1), jnp.float32)
    b2 = 0.1 * jax.random.normal(ks[3], (cout,), jnp.float32)
    if conv_short:
        ws = 0.1 * jax.random.normal(ks[4], (cout, cin, 3, 1), jnp.float32)
        bs = 0.1 * jax.random.normal(ks[5], (cout,), jnp.float32)
        short = (ws, bs, bn_params(ks[8]))
    else:
        short = None
    return (w1, b1, bn_params(ks[6]), w2, b2, bn_params(ks[7]), short)


if __name__ == "__main__":
    key = jax.random.PRNGKey(0)
    kx1, kp1, kx2, kp2 = jax.random.split(key, 4)

    # ---- config 1: conv shortcut (Cin != Cout, stride 2) ----
    B, Cin, H, W = 2, 4, 16, 16
    Cout, stride = 8, 2
    x1 = jax.random.normal(kx1, (B, Cin, H, W), jnp.float32)
    p1 = make_params(kp1, Cin, Cout, conv_short=True)
    out1 = jax.block_until_ready(block_forward(x1, p1, stride=stride))
    ref1 = block_ref(x1, p1, stride=stride)
    assert out1.shape == ref1.shape, (out1.shape, ref1.shape)
    err1 = float(jnp.max(jnp.abs(out1 - ref1)))
    assert err1 < 5e-2, err1          # bf16 matmul operands, f32 accumulation

    # ---- config 2: identity shortcut (Cin == Cout, stride 1) ----
    B2, C2, H2, W2 = 2, 8, 16, 16
    x2 = jax.random.normal(kx2, (B2, C2, H2, W2), jnp.float32)
    p2 = make_params(kp2, C2, C2, conv_short=False)
    out2 = jax.block_until_ready(block_forward(x2, p2, stride=1))
    ref2 = block_ref(x2, p2, stride=1)
    assert out2.shape == ref2.shape, (out2.shape, ref2.shape)
    err2 = float(jnp.max(jnp.abs(out2 - ref2)))
    assert err2 < 5e-2, err2

    print("KERNEL_OK")
</pallas_src>

<mosaic_0001>
module attributes {stable_mosaic.version = 11 : i64} {
  func.func @_block_kernel(%arg0: i32, %arg1: memref<36x128xbf16, #tpu.memory_space<vmem>>, %arg2: memref<8x36xbf16, #tpu.memory_space<vmem>>, %arg3: memref<8x12xbf16, #tpu.memory_space<vmem>>, %arg4: memref<8x8xbf16, #tpu.memory_space<vmem>>, %arg5: memref<2x8x1xf32, #tpu.memory_space<vmem>>, %arg6: memref<8x128xf32, #tpu.memory_space<vmem>>) attributes {dimension_semantics = [#tpu.dimension_semantics<parallel>], iteration_bounds = array<i64: 2>, scalar_prefetch = 0 : i64, scratch_operands = 0 : i64, tpu.core_type = #tpu.core_type<tc>, window_params = [{transform_indices = @transform_0, window_bounds = array<i64: 36, 128>}, {pipeline_mode = #tpu.pipeline_mode<synchronous>, transform_indices = @transform_1, window_bounds = array<i64: 8, 36>}, {pipeline_mode = #tpu.pipeline_mode<synchronous>, transform_indices = @transform_2, window_bounds = array<i64: 8, 12>}, {pipeline_mode = #tpu.pipeline_mode<synchronous>, transform_indices = @transform_3, window_bounds = array<i64: 8, 8>}, {pipeline_mode = #tpu.pipeline_mode<synchronous>, transform_indices = @transform_4, window_bounds = array<i64: 2, 8, 1>}, {transform_indices = @transform_5, window_bounds = array<i64: 8, 128>}]} {
    %c0 = arith.constant 0 : index
    %c0_0 = arith.constant 0 : index
    %0 = vector.load %arg1[%c0, %c0_0] : memref<36x128xbf16, #tpu.memory_space<vmem>>, vector<36x128xbf16>
    %c0_1 = arith.constant 0 : index
    %c0_2 = arith.constant 0 : index
    %1 = vector.load %arg2[%c0_1, %c0_2] : memref<8x36xbf16, #tpu.memory_space<vmem>>, vector<8x36xbf16>
    %cst = arith.constant dense<0.000000e+00> : vector<8x128xf32>
    %2 = tpu.matmul %1, %0, %cst {dimension_numbers = #tpu.dot_dimension_numbers<[1], [0], [0], [1], [0, 0, 1, 1], [], []>} : vector<8x36xbf16>, vector<36x128xbf16>, vector<8x128xf32> -> vector<8x128xf32>
    %c0_3 = arith.constant 0 : index
    %c0_4 = arith.constant 0 : index
    %c0_5 = arith.constant 0 : index
    %3 = vector.load %arg5[%c0_3, %c0_4, %c0_5] : memref<2x8x1xf32, #tpu.memory_space<vmem>>, vector<1x8x1xf32>
    %4 = vector.shape_cast %3 : vector<1x8x1xf32> to vector<8x1xf32>
    %5 = vector.broadcast %4 : vector<8x1xf32> to vector<8x128xf32>
    %6 = arith.addf %2, %5 : vector<8x128xf32>
    %cst_6 = arith.constant 0.000000e+00 : f32
    %7 = vector.broadcast %cst_6 : f32 to vector<8x128xf32>
    %8 = arith.maximumf %6, %7 : vector<8x128xf32>
    %c0_7 = arith.constant 0 : index
    %c0_8 = arith.constant 0 : index
    %9 = vector.load %arg4[%c0_7, %c0_8] : memref<8x8xbf16, #tpu.memory_space<vmem>>, vector<8x8xbf16>
    %10 = arith.truncf %8 : vector<8x128xf32> to vector<8x128xbf16>
    %cst_9 = arith.constant dense<0.000000e+00> : vector<8x128xf32>
    %11 = tpu.matmul %9, %10, %cst_9 {dimension_numbers = #tpu.dot_dimension_numbers<[1], [0], [0], [1], [0, 0, 1, 1], [], []>} : vector<8x8xbf16>, vector<8x128xbf16>, vector<8x128xf32> -> vector<8x128xf32>
    %c0_10 = arith.constant 0 : index
    %c0_11 = arith.constant 0 : index
    %12 = vector.load %arg3[%c0_10, %c0_11] : memref<8x12xbf16, #tpu.memory_space<vmem>>, vector<8x12xbf16>
    %13 = vector.extract_strided_slice %0 {offsets = [0, 0], sizes = [12, 128], strides = [1, 1]} : vector<36x128xbf16> to vector<12x128xbf16>
    %cst_12 = arith.constant dense<0.000000e+00> : vector<8x128xf32>
    %14 = tpu.matmul %12, %13, %cst_12 {dimension_numbers = #tpu.dot_dimension_numbers<[1], [0], [0], [1], [0, 0, 1, 1], [], []>} : vector<8x12xbf16>, vector<12x128xbf16>, vector<8x128xf32> -> vector<8x128xf32>
    %15 = arith.addf %11, %14 : vector<8x128xf32>
    %c1 = arith.constant 1 : index
    %c0_13 = arith.constant 0 : index
    %c0_14 = arith.constant 0 : index
    %16 = vector.load %arg5[%c1, %c0_13, %c0_14] : memref<2x8x1xf32, #tpu.memory_space<vmem>>, vector<1x8x1xf32>
    %17 = vector.shape_cast %16 : vector<1x8x1xf32> to vector<8x1xf32>
    %18 = vector.broadcast %17 : vector<8x1xf32> to vector<8x128xf32>
    %19 = arith.addf %15, %18 : vector<8x128xf32>
    %cst_15 = arith.constant 0.000000e+00 : f32
    %20 = vector.broadcast %cst_15 : f32 to vector<8x128xf32>
    %21 = arith.maximumf %19, %20 : vector<8x128xf32>
    %c0_16 = arith.constant 0 : index
    %c0_17 = arith.constant 0 : index
    %22 = vector.load %arg6[%c0_16, %c0_17] : memref<8x128xf32, #tpu.memory_space<vmem>>, vector<8x128xf32>
    tpu.vector_store %arg6[%c0_16, %c0_17], %21 {strides = array<i32>} : memref<8x128xf32, #tpu.memory_space<vmem>>, vector<8x128xf32>,
    return
  }
  func.func @transform_0(%arg0: i32) -> (i32, i32) {
    %c0_i32 = arith.constant 0 : i32
    %c0_i32_0 = arith.constant 0 : i32
    return %c0_i32, %arg0 : i32, i32
  }
  func.func @transform_1(%arg0: i32) -> (i32, i32) {
    %c0_i32 = arith.constant 0 : i32
    %c0_i32_0 = arith.constant 0 : i32
    %c0_i32_1 = arith.constant 0 : i32
    return %c0_i32, %c0_i32_0 : i32, i32
  }
  func.func @transform_2(%arg0: i32) -> (i32, i32) {
    %c0_i32 = arith.constant 0 : i32
    %c0_i32_0 = arith.constant 0 : i32
    %c0_i32_1 = arith.constant 0 : i32
    return %c0_i32, %c0_i32_0 : i32, i32
  }
  func.func @transform_3(%arg0: i32) -> (i32, i32) {
    %c0_i32 = arith.constant 0 : i32
    %c0_i32_0 = arith.constant 0 : i32
    %c0_i32_1 = arith.constant 0 : i32
    return %c0_i32, %c0_i32_0 : i32, i32
  }
  func.func @transform_4(%arg0: i32) -> (i32, i32, i32) {
    %c0_i32 = arith.constant 0 : i32
    %c0_i32_0 = arith.constant 0 : i32
    %c0_i32_1 = arith.constant 0 : i32
    %c0_i32_2 = arith.constant 0 : i32
    return %c0_i32, %c0_i32_0, %c0_i32_1 : i32, i32, i32
  }
  func.func @transform_5(%arg0: i32) -> (i32, i32) {
    %c0_i32 = arith.constant 0 : i32
    %c0_i32_0 = arith.constant 0 : i32
    return %c0_i32, %arg0 : i32, i32
  }
}

</mosaic_0001>

<llo_original>
// kernel: block_forward.1
$region0: #{block_forward.1}
  #allocation0 [shape = 'u32[]', space=smem, size = 0x4, offset = 0x4, fixed_abs, tag = 'smem constant byte address 0x4 - core index']
  #allocation1 [shape = 'u32[144,128]{1,0:T(1,128)}', space=vmem, size = 0x12000, scoped, tag = 'internal scratch']
  %s0 = inlined_call_operand.vmem [shape: bf16[36,256], index: 0, kind: input, shape index: {}]
  %s1 = inlined_call_operand.vmem [shape: bf16[8,36], index: 1, kind: input, shape index: {}]
  %s2 = inlined_call_operand.vmem [shape: bf16[8,12], index: 2, kind: input, shape index: {}]
  %s3 = inlined_call_operand.vmem [shape: bf16[8,8], index: 3, kind: input, shape index: {}]
  %s4 = inlined_call_operand.vmem [shape: f32[2,8,1], index: 4, kind: input, shape index: {}]
  %s5 = inlined_call_operand.vmem [shape: f32[8,256], index: 5, kind: output, shape index: {}]
  %s6 = sld [smem:[#allocation0]]
  $region94: #{block_forward.1} parent=0
    _
  %s8 = ssub.s32 1, %s6
  %s9 = scalar_select 0, %s8, %s6
  $region1: #{block_forward.1} parent=0
    #allocation2 [shape = 'u8[20480]{0}', space=vmem, size = 0x5000, scoped, tag = 'input window, operand 0']
    loop: start=0, step=1, limit=4
    $region2: #{block_forward.1} parent=1 // loop_pre_header
      _
    $region3: #{block_forward.1} parent=1 // loop_header
      %s11 = sphi 0, %s15
      %p12 = scmp.ge.s32.totalorder %s11, 4
      %s21 = sphi 0, %s23
      %s24 = sphi 0, %s21
      %s25 = sphi 0, %s24
      %s41 = sphi 0, %s25
      %s45 = sphi 0, %s45
      %s47 = sphi 0, %s45
      %s48 = sphi 0, %s47
      %s62 = sphi 0, %s48
      %s66 = sphi 0, %s66
      %s68 = sphi 0, %s66
      %s69 = sphi 0, %s68
      %s83 = sphi 0, %s69
      %s87 = sphi 0, %s87
      %s89 = sphi 0, %s87
      %s90 = sphi 0, %s89
      %s104 = sphi 0, %s90
      %s108 = sphi 0, %s108
      %s110 = sphi 0, %s108
      %s111 = sphi 0, %s110
      %s125 = sphi 0, %s111
      %s131 = sphi 0, %s133
      %s134 = sphi 0, %s131
      %s135 = sphi 0, %s134
      %s151 = sphi 0, %s135
    $region4: #{block_forward.1} parent=1 // loop_header_branch
      %14 = sbr.rel (%p12) target = $region8
    $region5: #{block_forward.1} parent=1 // loop_body
      %s16 = ssub.s32 %s11, 1
      %s17 = ssub.s32 %s11, 2
      %s18 = sadd.s32 %s11, 1
      %s19 = ssub.s32 %s11, %s18
      %p20 = scmp.eq.s32.totalorder %s19, 0
      %s22 = sadd.s32 %s21, 1
      %s23 = scalar_select %p20, %s21, %s22
      %p26 = pneg %p20
      %p27 = scmp.eq.s32.totalorder %s11, 1
      %p28 = por %p26, %p27
      %p29 = scmp.ne.s32.totalorder %s21, %s24
      %p30 = scmp.eq.s32.totalorder %s11, 0
      %p31 = por %p29, %p30
      %p32 = scmp.ne.s32.totalorder %s21, %s24
      %p33 = scmp.eq.s32.totalorder %s16, 1
      %p34 = por %p32, %p33
      %p35 = scmp.ne.s32.totalorder %s24, %s25
      %p36 = scmp.eq.s32.totalorder %s16, 0
      %p37 = por %p35, %p36
      %p38 = scmp.ne.s32.totalorder %s24, %s25
      %p39 = scmp.eq.s32.totalorder %s17, 1
      %p40 = por %p38, %p39
      %p42 = scmp.ne.s32.totalorder %s25, %s41
      %p43 = scmp.eq.s32.totalorder %s17, 0
      %p44 = por %p42, %p43
      %s46 = sadd.s32 %s45, 1
      %p49 = scmp.eq.s32.totalorder %s11, 1
      %p50 = scmp.ne.s32.totalorder %s45, %s47
      %p51 = scmp.eq.s32.totalorder %s11, 0
      %p52 = por %p50, %p51
      %p53 = scmp.ne.s32.totalorder %s45, %s47
      %p54 = scmp.eq.s32.totalorder %s16, 1
      %p55 = por %p53, %p54
      %p56 = scmp.ne.s32.totalorder %s47, %s48
      %p57 = scmp.eq.s32.totalorder %s16, 0
      %p58 = por %p56, %p57
      %p59 = scmp.ne.s32.totalorder %s47, %s48
      %p60 = scmp.eq.s32.totalorder %s17, 1
      %p61 = por %p59, %p60
      %p63 = scmp.ne.s32.totalorder %s48, %s62
      %p64 = scmp.eq.s32.totalorder %s17, 0
      %p65 = por %p63, %p64
      %s67 = sadd.s32 %s66, 1
      %p70 = scmp.eq.s32.totalorder %s11, 1
      %p71 = scmp.ne.s32.totalorder %s66, %s68
      %p72 = scmp.eq.s32.totalorder %s11, 0
      %p73 = por %p71, %p72
      %p74 = scmp.ne.s32.totalorder %s66, %s68
      %p75 = scmp.eq.s32.totalorder %s16, 1
      %p76 = por %p74, %p75
      %p77 = scmp.ne.s32.totalorder %s68, %s69
      %p78 = scmp.eq.s32.totalorder %s16, 0
      %p79 = por %p77, %p78
      %p80 = scmp.ne.s32.totalorder %s68, %s69
      %p81 = scmp.eq.s32.totalorder %s17, 1
      %p82 = por %p80, %p81
      %p84 = scmp.ne.s32.totalorder %s69, %s83
      %p85 = scmp.eq.s32.totalorder %s17, 0
      %p86 = por %p84, %p85
      %s88 = sadd.s32 %s87, 1
      %p91 = scmp.eq.s32.totalorder %s11, 1
      %p92 = scmp.ne.s32.totalorder %s87, %s89
      %p93 = scmp.eq.s32.totalorder %s11, 0
      %p94 = por %p92, %p93
      %p95 = scmp.ne.s32.totalorder %s87, %s89
      %p96 = scmp.eq.s32.totalorder %s16, 1
      %p97 = por %p95, %p96
      %p98 = scmp.ne.s32.totalorder %s89, %s90
      %p99 = scmp.eq.s32.totalorder %s16, 0
      %p100 = por %p98, %p99
      %p101 = scmp.ne.s32.totalorder %s89, %s90
      %p102 = scmp.eq.s32.totalorder %s17, 1
      %p103 = por %p101, %p102
      %p105 = scmp.ne.s32.totalorder %s90, %s104
      %p106 = scmp.eq.s32.totalorder %s17, 0
      %p107 = por %p105, %p106
      %s109 = sadd.s32 %s108, 1
      %p112 = scmp.eq.s32.totalorder %s11, 1
      %p113 = scmp.ne.s32.totalorder %s108, %s110
      %p114 = scmp.eq.s32.totalorder %s11, 0
      %p115 = por %p113, %p114
      %p116 = scmp.ne.s32.totalorder %s108, %s110
      %p117 = scmp.eq.s32.totalorder %s16, 1
      %p118 = por %p116, %p117
      %p119 = scmp.ne.s32.totalorder %s110, %s111
      %p120 = scmp.eq.s32.totalorder %s16, 0
      %p121 = por %p119, %p120
      %p122 = scmp.ne.s32.totalorder %s110, %s111
      %p123 = scmp.eq.s32.totalorder %s17, 1
      %p124 = por %p122, %p123
      %p126 = scmp.ne.s32.totalorder %s111, %s125
      %p127 = scmp.eq.s32.totalorder %s17, 0
      %p128 = por %p126, %p127
      %s129 = ssub.s32 %s11, %s18
      %p130 = scmp.eq.s32.totalorder %s129, 0
      %s132 = sadd.s32 %s131, 1
      %s133 = scalar_select %p130, %s131, %s132
      %p136 = pneg %p130
      %p137 = scmp.eq.s32.totalorder %s11, 1
      %p138 = por %p136, %p137
      %p139 = scmp.ne.s32.totalorder %s131, %s134
      %p140 = scmp.eq.s32.totalorder %s11, 0
      %p141 = por %p139, %p140
      %p142 = scmp.ne.s32.totalorder %s131, %s134
      %p143 = scmp.eq.s32.totalorder %s16, 1
      %p144 = por %p142, %p143
      %p145 = scmp.ne.s32.totalorder %s134, %s135
      %p146 = scmp.eq.s32.totalorder %s16, 0
      %p147 = por %p145, %p146
      %p148 = scmp.ne.s32.totalorder %s134, %s135
      %p149 = scmp.eq.s32.totalorder %s17, 1
      %p150 = por %p148, %p149
      %p152 = scmp.ne.s32.totalorder %s135, %s151
      %p153 = scmp.eq.s32.totalorder %s17, 0
      %p154 = por %p152, %p153
      %p155 = scmp.le.s32.totalorder 1, %s11
      %p156 = scmp.lt.s32.totalorder %s11, 3
      %p157 = pnand %p155, %p156
      %p158 = pneg %p157
      // Predicated region
      $region9: #{block_forward.1} parent=5 // pred_check
        _
      $region10: #{block_forward.1} parent=5 // pred_check_branch
        %160 = sbr.rel (%p157) target = $region12
      $region11: #{block_forward.1} parent=5 // pred_region
        %s161 = ssub.s32 %s11, 1
        // Predicated region
        $region13: #{block_forward.1} parent=11 // pred_check
          %p162 = pneg %p58
        $region14: #{block_forward.1} parent=11 // pred_check_branch
          %164 = sbr.rel (%p162) target = $region16
        $region15: #{block_forward.1} parent=11 // pred_region
          _
        $region16: #{block_forward.1} parent=11 // pred_fallthru
          _
        // Predicated region
        $region17: #{block_forward.1} parent=11 // pred_check
          %p165 = pneg %p79
        $region18: #{block_forward.1} parent=11 // pred_check_branch
          %167 = sbr.rel (%p165) target = $region20
        $region19: #{block_forward.1} parent=11 // pred_region
          _
        $region20: #{block_forward.1} parent=11 // pred_fallthru
          _
        // Predicated region
        $region21: #{block_forward.1} parent=11 // pred_check
          %p168 = pneg %p100
        $region22: #{block_forward.1} parent=11 // pred_check_branch
          %170 = sbr.rel (%p168) target = $region24
        $region23: #{block_forward.1} parent=11 // pred_region
          _
        $region24: #{block_forward.1} parent=11 // pred_fallthru
          _
        // Predicated region
        $region25: #{block_forward.1} parent=11 // pred_check
          %p171 = pneg %p121
        $region26: #{block_forward.1} parent=11 // pred_check_branch
          %173 = sbr.rel (%p171) target = $region28
        $region27: #{block_forward.1} parent=11 // pred_region
          _
        $region28: #{block_forward.1} parent=11 // pred_fallthru
          _
      $region12: #{block_forward.1} parent=5 // pred_fallthru
        _
      %p174 = scmp.lt.s32.totalorder %s11, 2
      // Predicated region
      $region29: #{block_forward.1} parent=5 // pred_check
        %p175 = pneg %p174
      $region30: #{block_forward.1} parent=5 // pred_check_branch
        %177 = sbr.rel (%p175) target = $region32
      $region31: #{block_forward.1} parent=5 // pred_region
        // Predicated region
        $region33: #{block_forward.1} parent=31 // pred_check
          %p178 = pneg %p31
        $region34: #{block_forward.1} parent=31 // pred_check_branch
          %180 = sbr.rel (%p178) target = $region36
        $region35: #{block_forward.1} parent=31 // pred_region
          %s181 = sand.u32 %s21, 1
          %s182 = sand.u32 %s21, 1
          %s183 = smul.addr %s182, 20
          %s184 = scalar_lea.vmem [#allocation2], %s183
          %s185 = smul.addr %s11, 4
          %s186 = scalar_lea.vmem %s0, %s185
          // Predicated region
          $region37: #{block_forward.1} parent=35 // pred_check
            _
          $region38: #{block_forward.1} parent=35 // pred_check_branch
            %188 = sbr.rel (0) target = $region40
          $region39: #{block_forward.1} parent=35 // pred_region
            // Predicated region
            $region41: #{block_forward.1} parent=39 // pred_check
              _
            $region42: #{block_forward.1} parent=39 // pred_check_branch
              %190 = sbr.rel target = $region44
            $region43: #{block_forward.1} parent=39 // pred_region
              // Predicated region
              $region56: #{block_forward.1} parent=43 // pred_check
                _
              $region57: #{block_forward.1} parent=43 // pred_check_branch
                %214 = sbr.rel (0) target = $region59
              $region58: #{block_forward.1} parent=43 // pred_region
                loop: start=0, step=1, limit=1
                $region60: #{block_forward.1} parent=58 // loop_pre_header
                  _
                $region61: #{block_forward.1} parent=58 // loop_header
                  %s216 = sphi 0, %s220
                  %p217 = scmp.ge.s32.totalorder %s216, 1
                  %s221 = sphi %s186, %s186
                  %s222 = sphi %s184, %s184
                $region62: #{block_forward.1} parent=58 // loop_header_branch
                  %219 = sbr.rel (%p217) target = $region66
                $region63: #{block_forward.1} parent=58 // loop_body
                  _
                $region64: #{block_forward.1} parent=58 // loop_footer
                  %s220 = sadd.s32 1, %s216
                $region65: #{block_forward.1} parent=58 // loop_footer_branch
                  %215 = sbr.rel target = $region61
                $region66: #{block_forward.1} parent=58 // loop_exit
                  _
                %s224 = ssub.s32 16, 1
                loop: start=0, step=1, limit=1
                $region67: #{block_forward.1} parent=58 // loop_pre_header
                  _
                $region68: #{block_forward.1} parent=58 // loop_header
                  %s226 = sphi 0, %s230
                  %p227 = scmp.ge.s32.totalorder %s226, 1
                  %s231 = sphi %s186, %s186
                  %s232 = sphi %s184, %s184
                $region69: #{block_forward.1} parent=58 // loop_header_branch
                  %229 = sbr.rel (%p227) target = $region73
                $region70: #{block_forward.1} parent=58 // loop_body
                  %v233 = vld [vmem:[%s231] sm:%s224]
                  %234 = vst [vmem:[%s232] sm:%s224] %v233
                  %v235 = vld [vmem:[%s231 + $0x8] sm:%s224]
                  %236 = vst [vmem:[%s232 + $0x4] sm:%s224] %v235
                  %v237 = vld [vmem:[%s231 + $0x10] sm:%s224]
                  %238 = vst [vmem:[%s232 + $0x8] sm:%s224] %v237
                  %v239 = vld [vmem:[%s231 + $0x18] sm:%s224]
                  %240 = vst [vmem:[%s232 + $0xc] sm:%s224] %v239
                  %v241 = vld [vmem:[%s231 + $0x20] sm:%s224]
                  %242 = vst [vmem:[%s232 + $0x10] sm:%s224] %v241
                $region71: #{block_forward.1} parent=58 // loop_footer
                  %s230 = sadd.s32 1, %s226
                $region72: #{block_forward.1} parent=58 // loop_footer_branch
                  %225 = sbr.rel target = $region68
                $region73: #{block_forward.1} parent=58 // loop_exit
                  _
              $region59: #{block_forward.1} parent=43 // pred_fallthru
                _
            $region44: #{block_forward.1} parent=39 // pred_fallthru
              _
            // Predicated region
            $region45: #{block_forward.1} parent=39 // pred_check
              _
            $region46: #{block_forward.1} parent=39 // pred_check_branch
              %192 = sbr.rel (0) target = $region48
            $region47: #{block_forward.1} parent=39 // pred_region
              %s194 = ssub.s32 16, 1
              loop: start=0, step=1, limit=1
              $region49: #{block_forward.1} parent=47 // loop_pre_header
                _
              $region50: #{block_forward.1} parent=47 // loop_header
                %s196 = sphi 0, %s200
                %p197 = scmp.ge.s32.totalorder %s196, 1
                %s201 = sphi %s186, %s186
                %s202 = sphi %s184, %s184
              $region51: #{block_forward.1} parent=47 // loop_header_branch
                %199 = sbr.rel (%p197) target = $region55
              $region52: #{block_forward.1} parent=47 // loop_body
                %v203 = vld [vmem:[%s201] sm:%s194]
                %204 = vst [vmem:[%s202] sm:%s194] %v203
                %v205 = vld [vmem:[%s201 + $0x8] sm:%s194]
                %206 = vst [vmem:[%s202 + $0x4] sm:%s194] %v205
                %v207 = vld [vmem:[%s201 + $0x10] sm:%s194]
                %208 = vst [vmem:[%s202 + $0x8] sm:%s194] %v207
                %v209 = vld [vmem:[%s201 + $0x18] sm:%s194]
                %210 = vst [vmem:[%s202 + $0xc] sm:%s194] %v209
                %v211 = vld [vmem:[%s201 + $0x20] sm:%s194]
                %212 = vst [vmem:[%s202 + $0x10] sm:%s194] %v211
              $region53: #{block_forward.1} parent=47 // loop_footer
                %s200 = sadd.s32 1, %s196
              $region54: #{block_forward.1} parent=47 // loop_footer_branch
                %195 = sbr.rel target = $region50
              $region55: #{block_forward.1} parent=47 // loop_exit
                _
            $region48: #{block_forward.1} parent=39 // pred_fallthru
              _
          $region40: #{block_forward.1} parent=35 // pred_fallthru
            _
          %243 = vnop
        $region36: #{block_forward.1} parent=31 // pred_fallthru
          _
      $region32: #{block_forward.1} parent=5 // pred_fallthru
        _
      %p244 = scmp.le.s32.totalorder 1, %s11
      %p245 = scmp.lt.s32.totalorder %s11, 3
      %p246 = pnand %p244, %p245
      %p247 = pneg %p246
      // Predicated region
      $region74: #{block_forward.1} parent=5 // pred_check
        _
      $region75: #{block_forward.1} parent=5 // pred_check_branch
        %249 = sbr.rel (%p246) target = $region77
      $region76: #{block_forward.1} parent=5 // pred_region
        %s250 = ssub.s32 %s11, 1
        %s251 = sand.u32 %s24, 1
        %s252 = sand.u32 %s24, 1
        %s253 = smul.addr %s252, 20
        %s254 = scalar_lea.vmem [#allocation2], %s253
        // Predicated region
        $region78: #{block_forward.1} parent=76 // pred_check
          %p255 = pneg %p37
        $region79: #{block_forward.1} parent=76 // pred_check_branch
          %257 = sbr.rel (%p255) target = $region81
        $region80: #{block_forward.1} parent=76 // pred_region
          _
        $region81: #{block_forward.1} parent=76 // pred_fallthru
          _
        %s258 = sand.u32 %s24, 1
        %s259 = sand.u32 %s24, 1
        %s260 = smul.addr %s259, 20
        %s261 = scalar_lea.vmem [#allocation2], %s260
        %p262 = pneg %p37
        %p263 = pneg %p34
        %p264 = pneg %p58
        %p265 = pneg %p55
        %p266 = pneg %p79
        %p267 = pneg %p76
        %p268 = pneg %p100
        %p269 = pneg %p97
        %p270 = pneg %p121
        %p271 = pneg %p118
        %p272 = pneg %p147
        %p273 = pneg %p144
        %p274 = scmp.lt.s32.totalorder %s16, 1
        %s275 = scalar_select %p274, %s16, 1
        %s276 = smul.addr %s275, 8
        %s277 = scalar_lea.vmem %s5, %s276
        %p278 = scmp.lt.s32.totalorder %s16, 1
        %s279 = scalar_select %p278, %s16, 1
        %s280 = smul.addr %s279, 8
        %s281 = scalar_lea.vmem %s5, %s280
        %v283 = vld [vmem:[%s254] sm:$0xf]
        %v284 = vld [vmem:[%s254 + $0x4] sm:$0xf]
        %v285 = vld [vmem:[%s254 + $0x8] sm:$0xf]
        %v286 = vld [vmem:[%s254 + $0xc] sm:$0xf]
        %v287 = vld [vmem:[%s254 + $0x10] sm:$0x3]
        %v288 = vld [vmem:[%s1] sm:$0xf]
        %v289 = vld [vmem:[%s4] sm:$0xff]
        %291 = vset.pattern.permute.xlu0 0
        %292 = vperm.xlu0 %291, %v289
        %v293 = vpop.permute.xlu0 %292
        %v300 = vunpack.c.l.b16 %v283
        %v301 = vunpack.c.l.b16 %v284
        %v302 = vunpack.c.l.b16 %v285
        %v303 = vunpack.c.l.b16 %v286
        %v304 = vunpack.c.l.b16 %v287
        %v305 = vpack.c.b16 %v301, %v300
        %v306 = vpack.c.b16 %v303, %v302
        %v307 = vpack.c.b16 %v304, %v304
        %vm310 = vcmask 293888
        %v312 = vsel %vm310, %v288, 0
        %vm314 = vcmask 1041408
        %v316 = vsel %vm314, %v307, 0
        %318 = vmatprep.subr.bf16.mxu0 0
        %319 = vmatpush1.bf16.msra.mxu0 0
        %320 = vmatprep.subr.bf16.mxu0 0
        %321 = vmatpush1.bf16.msra.mxu0 0
        %322 = vmatprep.subr.bf16.mxu0 0
        %323 = vmatpush1.bf16.msra.mxu0 0
        %324 = vmatprep.subr.bf16.mxu0 0
        %325 = vmatpush1.bf16.msra.mxu0 0
        %326 = vmatprep.subr.bf16.mxu0 0
        %327 = vmatpush1.bf16.msra.mxu0 0
        %328 = vmatprep.subr.bf16.mxu0 0
        %329 = vmatpush1.bf16.msra.mxu0 %v316
        %330 = vmatprep.subr.bf16.mxu0 0
        %331 = vmatpush1.bf16.msra.mxu0 %v306
        %332 = vmatprep.subr.bf16.mxu0 0
        %333 = vmatpush1.bf16.msra.mxu0 %v305
        %334 = vmatprep.subr.bf16.mxu0 0
        %335 = vmatpush2.bf16.msra.mxu0 0
        %336 = vmatprep.subr.bf16.mxu0 0
        %337 = vmatpush2.bf16.msra.mxu0 0
        %338 = vmatprep.subr.bf16.mxu0 0
        %339 = vmatpush2.bf16.msra.mxu0 0
        %340 = vmatprep.subr.bf16.mxu0 0
        %341 = vmatpush2.bf16.msra.mxu0 0
        %342 = vmatprep.subr.bf16.mxu0 0
        %343 = vmatpush2.bf16.msra.mxu0 0
        %344 = vmatprep.subr.bf16.mxu0 0
        %345 = vmatpush2.bf16.msra.mxu0 0
        %346 = vmatprep.subr.bf16.mxu0 0
        %347 = vmatpush2.bf16.msra.mxu0 0
        %348 = vmatprep.subr.bf16.mxu0 0
        %349 = vmatpush2.bf16.msra.mxu0 0
        %350 = vmatprep.mubr.bf16.mxu0 0
        %351 = vmatmul.mubr.bf16.gmra.mxu0 %v312
        %v352 = vpop.f32.mrf.mxu0
        %v353 = vadd.f32 %v293, %v352
        %v354 = vpop.f32.mrf.mxu0
        %v355 = vpop.f32.mrf.mxu0
        %v356 = vpop.f32.mrf.mxu0
        %357 = vdwg.mxu0
        %v358 = vmax.f32 %v353, 0.0
        %v359 = vld [vmem:[%s3] sm:$0xf]
        %v360 = vpack.c.bf16 %v358, %v358
        %v361 = vld [vmem:[%s2] sm:$0xf]
        %vm362 = vcmask 97280
        %v364 = vsel %vm362, %v361, 0
        %vm366 = vcmask 1045504
        %v368 = vsel %vm366, %v305, 0
        %370 = vmatprep.subr.bf16.mxu0 0
        %371 = vmatpush1.bf16.msra.mxu0 0
        %372 = vmatprep.subr.bf16.mxu0 0
        %373 = vmatpush1.bf16.msra.mxu0 0
        %374 = vmatprep.subr.bf16.mxu0 0
        %375 = vmatpush1.bf16.msra.mxu0 0
        %376 = vmatprep.subr.bf16.mxu0 0
        %377 = vmatpush1.bf16.msra.mxu0 0
        %378 = vmatprep.subr.bf16.mxu0 0
        %379 = vmatpush1.bf16.msra.mxu0 0
        %380 = vmatprep.subr.bf16.mxu0 0
        %381 = vmatpush1.bf16.msra.mxu0 0
        %382 = vmatprep.subr.bf16.mxu0 0
        %383 = vmatpush1.bf16.msra.mxu0 0
        %384 = vmatprep.subr.bf16.mxu0 0
        %385 = vmatpush1.bf16.msra.mxu0 %v368
        %386 = vmatprep.subr.bf16.mxu0 0
        %387 = vmatpush2.bf16.msra.mxu0 0
        %388 = vmatprep.subr.bf16.mxu0 0
        %389 = vmatpush2.bf16.msra.mxu0 0
        %390 = vmatprep.subr.bf16.mxu0 0
        %391 = vmatpush2.bf16.msra.mxu0 0
        %392 = vmatprep.subr.bf16.mxu0 0
        %393 = vmatpush2.bf16.msra.mxu0 0
        %394 = vmatprep.subr.bf16.mxu0 0
        %395 = vmatpush2.bf16.msra.mxu0 0
        %396 = vmatprep.subr.bf16.mxu0 0
        %397 = vmatpush2.bf16.msra.mxu0 0
        %398 = vmatprep.subr.bf16.mxu0 0
        %399 = vmatpush2.bf16.msra.mxu0 0
        %400 = vmatprep.subr.bf16.mxu0 0
        %401 = vmatpush2.bf16.msra.mxu0 0
        %402 = vmatprep.mubr.bf16.mxu0 0
        %403 = vmatmul.mubr.bf16.gmra.mxu0 %v364
        %v404 = vpop.f32.mrf.mxu0
        %v405 = vadd.f32 0.0, %v404
        %v406 = vpop.f32.mrf.mxu0
        %v407 = vpop.f32.mrf.mxu0
        %v408 = vpop.f32.mrf.mxu0
        %409 = vdwg.mxu0
        %vm410 = vcmask 64512
        %v412 = vsel %vm410, %v359, 0
        %vm414 = vcmask 1043456
        %v416 = vsel %vm414, %v360, 0
        %418 = vmatprep.subr.bf16.mxu0 0
        %419 = vmatpush1.bf16.msra.mxu0 0
        %420 = vmatprep.subr.bf16.mxu0 0
        %421 = vmatpush1.bf16.msra.mxu0 0
        %422 = vmatprep.subr.bf16.mxu0 0
        %423 = vmatpush1.bf16.msra.mxu0 0
        %424 = vmatprep.subr.bf16.mxu0 0
        %425 = vmatpush1.bf16.msra.mxu0 0
        %426 = vmatprep.subr.bf16.mxu0 0
        %427 = vmatpush1.bf16.msra.mxu0 0
        %428 = vmatprep.subr.bf16.mxu0 0
        %429 = vmatpush1.bf16.msra.mxu0 0
        %430 = vmatprep.subr.bf16.mxu0 0
        %431 = vmatpush1.bf16.msra.mxu0 0
        %432 = vmatprep.subr.bf16.mxu0 0
        %433 = vmatpush1.bf16.msra.mxu0 %v416
        %434 = vmatprep.subr.bf16.mxu0 0
        %435 = vmatpush2.bf16.msra.mxu0 0
        %436 = vmatprep.subr.bf16.mxu0 0
        %437 = vmatpush2.bf16.msra.mxu0 0
        %438 = vmatprep.subr.bf16.mxu0 0
        %439 = vmatpush2.bf16.msra.mxu0 0
        %440 = vmatprep.subr.bf16.mxu0 0
        %441 = vmatpush2.bf16.msra.mxu0 0
        %442 = vmatprep.subr.bf16.mxu0 0
        %443 = vmatpush2.bf16.msra.mxu0 0
        %444 = vmatprep.subr.bf16.mxu0 0
        %445 = vmatpush2.bf16.msra.mxu0 0
        %446 = vmatprep.subr.bf16.mxu0 0
        %447 = vmatpush2.bf16.msra.mxu0 0
        %448 = vmatprep.subr.bf16.mxu0 0
        %449 = vmatpush2.bf16.msra.mxu0 0
        %450 = vmatprep.mubr.bf16.mxu0 0
        %451 = vmatmul.mubr.bf16.gmra.mxu0 %v412
        %v452 = vpop.f32.mrf.mxu0
        %v453 = vadd.f32 %v405, %v452
        %v454 = vpop.f32.mrf.mxu0
        %v455 = vpop.f32.mrf.mxu0
        %v456 = vpop.f32.mrf.mxu0
        %457 = vdwg.mxu0
        %s458 = scalar_lea.vmem %s4, 8
        %v459 = vld [vmem:[%s458] sm:$0xff]
        %461 = vset.pattern.permute.xlu0 0
        %462 = vperm.xlu0 %461, %v459
        %v463 = vpop.permute.xlu0 %462
        %v465 = vadd.f32 %v453, %v463
        %v466 = vmax.f32 %v465, 0.0
        %467 = vst [vmem:[%s281] sm:$0xff] %v466
        %p468 = scmp.lt.s32.totalorder %s16, 1
        %s469 = scalar_select %p468, %s16, 1
        %s470 = smul.addr %s469, 8
        %s471 = scalar_lea.vmem %s5, %s470
        // Predicated region
        $region82: #{block_forward.1} parent=76 // pred_check
          %p472 = pneg %p144
        $region83: #{block_forward.1} parent=76 // pred_check_branch
          %474 = sbr.rel (%p472) target = $region85
        $region84: #{block_forward.1} parent=76 // pred_region
          _
        $region85: #{block_forward.1} parent=76 // pred_fallthru
          _
      $region77: #{block_forward.1} parent=5 // pred_fallthru
        _
      %p475 = scmp.le.s32.totalorder 2, %s11
      // Predicated region
      $region86: #{block_forward.1} parent=5 // pred_check
        %p476 = pneg %p475
      $region87: #{block_forward.1} parent=5 // pred_check_branch
        %478 = sbr.rel (%p476) target = $region89
      $region88: #{block_forward.1} parent=5 // pred_region
        %s479 = ssub.s32 %s11, 2
        // Predicated region
        $region90: #{block_forward.1} parent=88 // pred_check
          %p480 = pneg %p150
        $region91: #{block_forward.1} parent=88 // pred_check_branch
          %482 = sbr.rel (%p480) target = $region93
        $region92: #{block_forward.1} parent=88 // pred_region
          %p483 = scmp.lt.s32.totalorder %s17, 1
          %s484 = scalar_select %p483, %s17, 1
          %s485 = smul.addr %s484, 8
          %s486 = scalar_lea.vmem %s5, %s485
        $region93: #{block_forward.1} parent=88 // pred_fallthru
          _
      $region89: #{block_forward.1} parent=5 // pred_fallthru
        _
    $region6: #{block_forward.1} parent=1 // loop_footer
      %s15 = sadd.s32 1, %s11
    $region7: #{block_forward.1} parent=1 // loop_footer_branch
      %10 = sbr.rel target = $region3
    $region8: #{block_forward.1} parent=1 // loop_exit
      _

</llo_original>
